<compile_context>
chip_gen: v7x
topology: tpu7x:2x2x1
jax: 0.10.0
libtpu: 0.0.40
codegen_flags: <defaults>
</compile_context>

<pallas_src>
import jax
import jax.numpy as jnp
from jax.experimental import pallas as pl
from jax.experimental.pallas import tpu as pltpu


def _round_up(x, m):
    return ((x + m - 1) // m) * m


def _two_layer_kernel(x_ref, w1_ref, b1_ref, w2_ref, b2_ref, o_ref):
    """One batch tile: sigmoid(x @ w1t + b1) @ w2t + b2 (lane-padded output).

    x_ref : [tb, D]    f32  (cast to bf16 here, right before the MXU)
    w1_ref: [D, Hid]   bf16 (pre-transposed, MXU-native [K, N])
    b1_ref: [1, Hid]   f32
    w2_ref: [Hid, Cp]  bf16 (pre-transposed + zero-padded to Cp = 128k lanes)
    b2_ref: [1, Cp]    f32  (zero-padded)
    o_ref : [tb, Cp]   f32  (lane-dense stores; wrapper slices back to C)
    """
    # In-kernel f32 -> bf16 cast of the streamed activations (review item 1).
    x_bf = x_ref[...].astype(jnp.bfloat16)
    # fcl1: [tb, D] @ [D, Hid] -> [tb, Hid], bf16 MXU inputs, f32 accumulation.
    h = jnp.dot(x_bf, w1_ref[...], preferred_element_type=jnp.float32)
    # Bias + sigmoid in f32 (safe on v5e: no bf16 VPU/EUP there).
    h = jax.nn.sigmoid(h + b1_ref[...])
    # fcl2: [tb, Hid] @ [Hid, Cp] -> [tb, Cp]; cast activations back to bf16 so
    # this matmul also runs at bf16 MXU rate; accumulation stays f32.
    out = jnp.dot(h.astype(jnp.bfloat16), w2_ref[...],
                  preferred_element_type=jnp.float32)
    o_ref[...] = (out + b2_ref[...]).astype(o_ref.dtype)


def _vmem_budget():
    """Return (tile-sizing budget, vmem_limit_bytes) derived from the part."""
    cap = 64 * 1024 * 1024  # conservative default: assume a v7x-like 64-MiB part
    try:
        info = pltpu.get_tpu_info()
        cap = int(getattr(info, "vmem_capacity_bytes", cap))
    except Exception:
        pass
    if cap >= 120 * 1024 * 1024:      # v5e / v6e: 128 MiB physical VMEM
        return 56 * 1024 * 1024, 64 * 1024 * 1024
    return 32 * 1024 * 1024, 40 * 1024 * 1024


def _kernel_vmem_bytes(tb, D, Hid, Cpad):
    """Conservative per-step VMEM footprint: double-buffered input AND output
    blocks, resident (still double-buffered) weights/biases, intermediates."""
    x_bytes = 2 * tb * D * 4                         # f32 activation blocks
    out_bytes = 2 * tb * Cpad * 4                    # f32 padded output blocks
    w_bytes = 2 * (D * Hid + Hid * Cpad) * 2         # bf16 resident weights
    b_bytes = 2 * (Hid + Cpad) * 4                   # f32 resident biases
    tmp_bytes = tb * D * 2 + tb * (Hid + Cpad) * 4   # bf16 x cast + f32 h / out
    return x_bytes + out_bytes + w_bytes + b_bytes + tmp_bytes


# Multiples of 16 only (bf16 packs 16 rows per sublane group); no tb=8.
_TILE_CANDIDATES = (2048, 1024, 512, 256, 128, 64, 32, 16)


def _pick_batch_tile(B, D, Hid, Cpad, vmem_budget):
    b16 = _round_up(max(B, 16), 16)
    candidates = [tb for tb in _TILE_CANDIDATES
                  if tb <= b16 and _kernel_vmem_bytes(tb, D, Hid, Cpad) <= vmem_budget]
    if not candidates:
        return 16
    # Prefer the largest tile that still yields >= 4 grid steps (pipeline depth
    # and room for megacore to split the batch axis); otherwise take the
    # largest tile that fits (tiny batches -> single step).
    for tb in candidates:
        if pl.cdiv(b16, tb) >= 4:
            return tb
    return candidates[0]


def prepare_params(w1, b1, w2, b2):
    """One-time parameter prep, hoisted out of the per-forward path:
    cast to bf16, transpose to MXU-native [K, N], lane-pad the class dim.

    w1: [Hid, D], b1: [Hid], w2: [C, Hid], b2: [C]   (PyTorch nn.Linear layout)
    """
    Hid, D = w1.shape
    C = w2.shape[0]
    Cpad = _round_up(max(C, 128), 128)
    w1t = jnp.asarray(w1, jnp.bfloat16).T                         # [D, Hid]
    w2t = jnp.zeros((Hid, Cpad), jnp.bfloat16)
    w2t = w2t.at[:, :C].set(jnp.asarray(w2, jnp.bfloat16).T)      # [Hid, Cpad]
    b1_2d = jnp.asarray(b1, jnp.float32).reshape(1, Hid)
    b2_2d = jnp.zeros((1, Cpad), jnp.float32).at[0, :C].set(
        jnp.asarray(b2, jnp.float32))
    return {"w1t": w1t, "b1": b1_2d, "w2t": w2t, "b2": b2_2d, "num_classes": C}


def two_layer_net(x, params):
    """Forward pass of TwoLayerNet: flatten -> Linear -> Sigmoid -> Linear.

    x: [B, ...] (trailing dims flattened like torch.flatten(x, 1))
    params: output of prepare_params(...)
    returns: [B, num_classes] float32
    """
    w1t, b1 = params["w1t"], params["b1"]
    w2t, b2 = params["w2t"], params["b2"]
    C = params["num_classes"]

    B = x.shape[0]
    x2d = x.reshape(B, -1).astype(jnp.float32)   # stream f32; bf16 cast is in-kernel
    D = x2d.shape[1]
    Hid = w1t.shape[1]
    Cpad = w2t.shape[1]
    assert w1t.shape[0] == D, "input_dim mismatch between x and w1"

    vmem_budget, vmem_limit = _vmem_budget()
    tb = _pick_batch_tile(B, D, Hid, Cpad, vmem_budget)
    Bp = _round_up(max(B, tb), tb)
    if Bp != B:
        # Ragged / tiny batch: pad the batch dim (keeps bounded VMEM and the
        # double-buffered DMA pipeline) instead of a whole-array VMEM fallback.
        x2d = jnp.pad(x2d, ((0, Bp - B), (0, 0)))

    grid = (Bp // tb,)
    cost = pl.CostEstimate(
        flops=2 * Bp * (D * Hid + Hid * Cpad),
        transcendentals=Bp * Hid,
        bytes_accessed=(Bp * D * 4 + D * Hid * 2 + Hid * Cpad * 2
                        + Hid * 4 + Cpad * 4 + Bp * Cpad * 4),
    )

    out_pad = pl.pallas_call(
        _two_layer_kernel,
        out_shape=jax.ShapeDtypeStruct((Bp, Cpad), jnp.float32),
        grid=grid,
        in_specs=[
            pl.BlockSpec((tb, D), lambda i: (i, 0)),      # x: streamed f32 blocks
            pl.BlockSpec((D, Hid), lambda i: (0, 0)),     # w1^T: resident
            pl.BlockSpec((1, Hid), lambda i: (0, 0)),     # b1: resident
            pl.BlockSpec((Hid, Cpad), lambda i: (0, 0)),  # w2^T: resident, lane-padded
            pl.BlockSpec((1, Cpad), lambda i: (0, 0)),    # b2: resident, lane-padded
        ],
        out_specs=pl.BlockSpec((tb, Cpad), lambda i: (i, 0)),  # lane-dense (Cpad % 128 == 0)
        compiler_params=pltpu.CompilerParams(
            dimension_semantics=("parallel",),
            vmem_limit_bytes=vmem_limit),
        cost_estimate=cost,
    )(x2d, w1t, b1, w2t, b2)

    return out_pad[:B, :C]


def init_params(key, input_dim, hidden_size, num_classes):
    """Deterministic init mimicking nn.Linear (uniform +-1/sqrt(fan_in))."""
    k1, k2, k3, k4 = jax.random.split(key, 4)
    bound1 = 1.0 / jnp.sqrt(input_dim)
    bound2 = 1.0 / jnp.sqrt(hidden_size)
    w1 = jax.random.uniform(k1, (hidden_size, input_dim), jnp.float32,
                            -bound1, bound1)
    b1 = jax.random.uniform(k2, (hidden_size,), jnp.float32, -bound1, bound1)
    w2 = jax.random.uniform(k3, (num_classes, hidden_size), jnp.float32,
                            -bound2, bound2)
    b2 = jax.random.uniform(k4, (num_classes,), jnp.float32, -bound2, bound2)
    return w1, b1, w2, b2


def _reference_bf16(x, w1, b1, w2, b2):
    """Pure-JAX reference emulating the kernel's bf16-input / f32-accum math."""
    B = x.shape[0]
    x2d = x.reshape(B, -1).astype(jnp.float32)
    xb = x2d.astype(jnp.bfloat16).astype(jnp.float32)
    w1b = jnp.asarray(w1, jnp.bfloat16).astype(jnp.float32)
    w2b = jnp.asarray(w2, jnp.bfloat16).astype(jnp.float32)
    h = jax.nn.sigmoid(xb @ w1b.T + b1)
    hb = h.astype(jnp.bfloat16).astype(jnp.float32)
    return hb @ w2b.T + b2


if __name__ == "__main__":
    key = jax.random.PRNGKey(0)
    kx, kp, kx2 = jax.random.split(key, 3)

    # Small shapes: NCHW image batch -> input_dim = 4*16*16 = 1024
    B, Cc, Hh, Ww = 2, 4, 16, 16
    input_dim = Cc * Hh * Ww
    hidden_size = 32
    num_classes = 10

    x = jax.random.normal(kx, (B, Cc, Hh, Ww), jnp.float32)
    w1, b1, w2, b2 = init_params(kp, input_dim, hidden_size, num_classes)
    params = prepare_params(w1, b1, w2, b2)   # one-time: bf16 cast + transpose + lane-pad

    # --- path 1: tiny batch (B=2 -> padded to one 16-row tile, grid=(1,)) ---
    out = jax.block_until_ready(two_layer_net(x, params))
    assert out.shape == (B, num_classes)
    ref_bf = _reference_bf16(x, w1, b1, w2, b2)
    ref_f32 = jax.nn.sigmoid(x.reshape(B, -1) @ w1.T + b1) @ w2.T + b2
    assert jnp.allclose(out, ref_bf, atol=1e-2, rtol=1e-2), "mismatch vs bf16 reference"
    assert jnp.allclose(out, ref_f32, atol=5e-2, rtol=5e-2), "mismatch vs f32 reference"

    # --- path 2: ragged batch (B=200 -> padded to a tile multiple, multi-step grid) ---
    B2 = 200
    x2 = jax.random.normal(kx2, (B2, Cc, Hh, Ww), jnp.float32)
    out2 = jax.block_until_ready(two_layer_net(x2, params))
    assert out2.shape == (B2, num_classes)
    ref2 = _reference_bf16(x2, w1, b1, w2, b2)
    assert jnp.allclose(out2, ref2, atol=1e-2, rtol=1e-2), "mismatch vs bf16 reference (ragged)"

    print("KERNEL_OK")
</pallas_src>

<mosaic_0001>
module attributes {stable_mosaic.version = 11 : i64} {
  func.func @_two_layer_kernel(%arg0: i32, %arg1: memref<16x1024xf32, #tpu.memory_space<vmem>>, %arg2: memref<1024x32xbf16, #tpu.memory_space<vmem>>, %arg3: memref<1x32xf32, #tpu.memory_space<vmem>>, %arg4: memref<32x128xbf16, #tpu.memory_space<vmem>>, %arg5: memref<1x128xf32, #tpu.memory_space<vmem>>, %arg6: memref<16x128xf32, #tpu.memory_space<vmem>>) attributes {dimension_semantics = [#tpu.dimension_semantics<parallel>], iteration_bounds = array<i64: 1>, scalar_prefetch = 0 : i64, scratch_operands = 0 : i64, tpu.core_type = #tpu.core_type<tc>, window_params = [{transform_indices = @transform_0, window_bounds = array<i64: 16, 1024>}, {pipeline_mode = #tpu.pipeline_mode<synchronous>, transform_indices = @transform_1, window_bounds = array<i64: 1024, 32>}, {pipeline_mode = #tpu.pipeline_mode<synchronous>, transform_indices = @transform_2, window_bounds = array<i64: 1, 32>}, {pipeline_mode = #tpu.pipeline_mode<synchronous>, transform_indices = @transform_3, window_bounds = array<i64: 32, 128>}, {pipeline_mode = #tpu.pipeline_mode<synchronous>, transform_indices = @transform_4, window_bounds = array<i64: 1, 128>}, {transform_indices = @transform_5, window_bounds = array<i64: 16, 128>}]} {
    %c0 = arith.constant 0 : index
    %c0_0 = arith.constant 0 : index
    %0 = vector.load %arg1[%c0, %c0_0] : memref<16x1024xf32, #tpu.memory_space<vmem>>, vector<16x1024xf32>
    %1 = arith.truncf %0 : vector<16x1024xf32> to vector<16x1024xbf16>
    %c0_1 = arith.constant 0 : index
    %c0_2 = arith.constant 0 : index
    %2 = vector.load %arg2[%c0_1, %c0_2] : memref<1024x32xbf16, #tpu.memory_space<vmem>>, vector<1024x32xbf16>
    %cst = arith.constant dense<0.000000e+00> : vector<16x32xf32>
    %3 = tpu.matmul %1, %2, %cst {dimension_numbers = #tpu.dot_dimension_numbers<[1], [0], [0], [1], [0, 0, 1, 1], [], []>} : vector<16x1024xbf16>, vector<1024x32xbf16>, vector<16x32xf32> -> vector<16x32xf32>
    %c0_3 = arith.constant 0 : index
    %c0_4 = arith.constant 0 : index
    %4 = vector.load %arg3[%c0_3, %c0_4] : memref<1x32xf32, #tpu.memory_space<vmem>>, vector<1x32xf32>
    %5 = vector.broadcast %4 : vector<1x32xf32> to vector<16x32xf32>
    %6 = arith.addf %3, %5 : vector<16x32xf32>
    %7 = arith.negf %6 : vector<16x32xf32>
    %8 = math.exp %7 : vector<16x32xf32>
    %cst_5 = arith.constant 1.000000e+00 : f32
    %9 = vector.broadcast %cst_5 : f32 to vector<16x32xf32>
    %10 = arith.addf %9, %8 : vector<16x32xf32>
    %11 = arith.divf %9, %10 : vector<16x32xf32>
    %12 = arith.truncf %11 : vector<16x32xf32> to vector<16x32xbf16>
    %c0_6 = arith.constant 0 : index
    %c0_7 = arith.constant 0 : index
    %13 = vector.load %arg4[%c0_6, %c0_7] : memref<32x128xbf16, #tpu.memory_space<vmem>>, vector<32x128xbf16>
    %cst_8 = arith.constant dense<0.000000e+00> : vector<16x128xf32>
    %14 = tpu.matmul %12, %13, %cst_8 {dimension_numbers = #tpu.dot_dimension_numbers<[1], [0], [0], [1], [0, 0, 1, 1], [], []>} : vector<16x32xbf16>, vector<32x128xbf16>, vector<16x128xf32> -> vector<16x128xf32>
    %c0_9 = arith.constant 0 : index
    %c0_10 = arith.constant 0 : index
    %15 = vector.load %arg5[%c0_9, %c0_10] : memref<1x128xf32, #tpu.memory_space<vmem>>, vector<1x128xf32>
    %16 = vector.broadcast %15 : vector<1x128xf32> to vector<16x128xf32>
    %17 = arith.addf %14, %16 : vector<16x128xf32>
    %c0_11 = arith.constant 0 : index
    %c0_12 = arith.constant 0 : index
    %18 = vector.load %arg6[%c0_11, %c0_12] : memref<16x128xf32, #tpu.memory_space<vmem>>, vector<16x128xf32>
    tpu.vector_store %arg6[%c0_11, %c0_12], %17 {strides = array<i32>} : memref<16x128xf32, #tpu.memory_space<vmem>>, vector<16x128xf32>,
    return
  }
  func.func @transform_0(%arg0: i32) -> (i32, i32) {
    %c0_i32 = arith.constant 0 : i32
    %c0_i32_0 = arith.constant 0 : i32
    return %arg0, %c0_i32 : i32, i32
  }
  func.func @transform_1(%arg0: i32) -> (i32, i32) {
    %c0_i32 = arith.constant 0 : i32
    %c0_i32_0 = arith.constant 0 : i32
    %c0_i32_1 = arith.constant 0 : i32
    return %c0_i32, %c0_i32_0 : i32, i32
  }
  func.func @transform_2(%arg0: i32) -> (i32, i32) {
    %c0_i32 = arith.constant 0 : i32
    %c0_i32_0 = arith.constant 0 : i32
    %c0_i32_1 = arith.constant 0 : i32
    return %c0_i32, %c0_i32_0 : i32, i32
  }
  func.func @transform_3(%arg0: i32) -> (i32, i32) {
    %c0_i32 = arith.constant 0 : i32
    %c0_i32_0 = arith.constant 0 : i32
    %c0_i32_1 = arith.constant 0 : i32
    return %c0_i32, %c0_i32_0 : i32, i32
  }
  func.func @transform_4(%arg0: i32) -> (i32, i32) {
    %c0_i32 = arith.constant 0 : i32
    %c0_i32_0 = arith.constant 0 : i32
    %c0_i32_1 = arith.constant 0 : i32
    return %c0_i32, %c0_i32_0 : i32, i32
  }
  func.func @transform_5(%arg0: i32) -> (i32, i32) {
    %c0_i32 = arith.constant 0 : i32
    %c0_i32_0 = arith.constant 0 : i32
    return %arg0, %c0_i32 : i32, i32
  }
}

</mosaic_0001>

<llo_original>
// kernel: tpu_custom_call.1
$region0: #{tpu_custom_call.1}
  #allocation0 [shape = 'u32[]', space=smem, size = 0x4, offset = 0x4, fixed_abs, tag = 'smem constant byte address 0x4 - core index']
  #allocation1 [shape = 'u32[144,128]{1,0:T(1,128)}', space=vmem, size = 0x12000, scoped, tag = 'internal scratch']
  %s0 = inlined_call_operand.vmem [shape: f32[16,1024], index: 0, kind: input, shape index: {}]
  %s1 = inlined_call_operand.vmem [shape: bf16[1024,32], index: 1, kind: input, shape index: {}]
  %s2 = inlined_call_operand.vmem [shape: f32[1,32], index: 2, kind: input, shape index: {}]
  %s3 = inlined_call_operand.vmem [shape: bf16[32,128], index: 3, kind: input, shape index: {}]
  %s4 = inlined_call_operand.vmem [shape: f32[1,128], index: 4, kind: input, shape index: {}]
  %s5 = inlined_call_operand.hbm [shape: f32[16,128], index: 5, kind: output, shape index: {}]
  %s6 = sld [smem:[#allocation0]]
  $region30: #{tpu_custom_call.1} parent=0
    _
  %s8 = ssub.s32 1, %s6
  %s9 = scalar_select 0, %s8, %s6
  $region1: #{tpu_custom_call.1} parent=0
    #allocation2 [shape = 'u8[8192]{0}', space=vmem, size = 0x2000, scoped, tag = 'output window, operand 0, single buffered']
    #allocation3 [shape = 's32[1]{0}', space=sflag, size = 0x4, scoped, tag = 'scoped memory for tpu_custom_call.1']
    %10 = vsyncpa [#allocation3], 0
    // Predicated region
    $region2: #{tpu_custom_call.1} parent=1 // pred_check
      _
    $region3: #{tpu_custom_call.1} parent=1 // pred_check_branch
      %12 = sbr.rel (0) target = $region5
    $region4: #{tpu_custom_call.1} parent=1 // pred_region
      _
    $region5: #{tpu_custom_call.1} parent=1 // pred_fallthru
      _
    // Predicated region
    $region6: #{tpu_custom_call.1} parent=1 // pred_check
      _
    $region7: #{tpu_custom_call.1} parent=1 // pred_check_branch
      %14 = sbr.rel (0) target = $region9
    $region8: #{tpu_custom_call.1} parent=1 // pred_region
      _
    $region9: #{tpu_custom_call.1} parent=1 // pred_fallthru
      _
    // Predicated region
    $region10: #{tpu_custom_call.1} parent=1 // pred_check
      _
    $region11: #{tpu_custom_call.1} parent=1 // pred_check_branch
      %16 = sbr.rel (0) target = $region13
    $region12: #{tpu_custom_call.1} parent=1 // pred_region
      _
    $region13: #{tpu_custom_call.1} parent=1 // pred_fallthru
      _
    // Predicated region
    $region14: #{tpu_custom_call.1} parent=1 // pred_check
      _
    $region15: #{tpu_custom_call.1} parent=1 // pred_check_branch
      %18 = sbr.rel (0) target = $region17
    $region16: #{tpu_custom_call.1} parent=1 // pred_region
      _
    $region17: #{tpu_custom_call.1} parent=1 // pred_fallthru
      _
    // Predicated region
    $region18: #{tpu_custom_call.1} parent=1 // pred_check
      _
    $region19: #{tpu_custom_call.1} parent=1 // pred_check_branch
      %20 = sbr.rel (0) target = $region21
    $region20: #{tpu_custom_call.1} parent=1 // pred_region
      _
    $region21: #{tpu_custom_call.1} parent=1 // pred_fallthru
      _
    %v22 = vld [vmem:[%s0] sm:$0xff]
    %v23 = vld [vmem:[%s0 + $0x8] sm:$0xff]
    %v24 = vld [vmem:[%s0 + $0x10] sm:$0xff]
    %v25 = vld [vmem:[%s0 + $0x18] sm:$0xff]
    %v26 = vld [vmem:[%s0 + $0x20] sm:$0xff]
    %v27 = vld [vmem:[%s0 + $0x28] sm:$0xff]
    %v28 = vld [vmem:[%s0 + $0x30] sm:$0xff]
    %v29 = vld [vmem:[%s0 + $0x38] sm:$0xff]
    %v30 = vld [vmem:[%s0 + $0x40] sm:$0xff]
    %v31 = vld [vmem:[%s0 + $0x48] sm:$0xff]
    %v32 = vld [vmem:[%s0 + $0x50] sm:$0xff]
    %v33 = vld [vmem:[%s0 + $0x58] sm:$0xff]
    %v34 = vld [vmem:[%s0 + $0x60] sm:$0xff]
    %v35 = vld [vmem:[%s0 + $0x68] sm:$0xff]
    %v36 = vld [vmem:[%s0 + $0x70] sm:$0xff]
    %v37 = vld [vmem:[%s0 + $0x78] sm:$0xff]
    %v38 = vpack.c.bf16 %v30, %v22
    %v39 = vpack.c.bf16 %v31, %v23
    %v40 = vpack.c.bf16 %v32, %v24
    %v41 = vpack.c.bf16 %v33, %v25
    %v42 = vpack.c.bf16 %v34, %v26
    %v43 = vpack.c.bf16 %v35, %v27
    %v44 = vpack.c.bf16 %v36, %v28
    %v45 = vpack.c.bf16 %v37, %v29
    %v46 = vld [vmem:[%s1] sm:$0xf]
    %v47 = vld [vmem:[%s1 + $0x4] sm:$0xf]
    %v48 = vld [vmem:[%s1 + $0x8] sm:$0xf]
    %v49 = vld [vmem:[%s1 + $0xc] sm:$0xf]
    %v50 = vld [vmem:[%s1 + $0x10] sm:$0xf]
    %v51 = vld [vmem:[%s1 + $0x14] sm:$0xf]
    %v52 = vld [vmem:[%s1 + $0x18] sm:$0xf]
    %v53 = vld [vmem:[%s1 + $0x1c] sm:$0xf]
    %v54 = vld [vmem:[%s1 + $0x20] sm:$0xf]
    %v55 = vld [vmem:[%s1 + $0x24] sm:$0xf]
    %v56 = vld [vmem:[%s1 + $0x28] sm:$0xf]
    %v57 = vld [vmem:[%s1 + $0x2c] sm:$0xf]
    %v58 = vld [vmem:[%s1 + $0x30] sm:$0xf]
    %v59 = vld [vmem:[%s1 + $0x34] sm:$0xf]
    %v60 = vld [vmem:[%s1 + $0x38] sm:$0xf]
    %v61 = vld [vmem:[%s1 + $0x3c] sm:$0xf]
    %v62 = vld [vmem:[%s1 + $0x40] sm:$0xf]
    %v63 = vld [vmem:[%s1 + $0x44] sm:$0xf]
    %v64 = vld [vmem:[%s1 + $0x48] sm:$0xf]
    %v65 = vld [vmem:[%s1 + $0x4c] sm:$0xf]
    %v66 = vld [vmem:[%s1 + $0x50] sm:$0xf]
    %v67 = vld [vmem:[%s1 + $0x54] sm:$0xf]
    %v68 = vld [vmem:[%s1 + $0x58] sm:$0xf]
    %v69 = vld [vmem:[%s1 + $0x5c] sm:$0xf]
    %v70 = vld [vmem:[%s1 + $0x60] sm:$0xf]
    %v71 = vld [vmem:[%s1 + $0x64] sm:$0xf]
    %v72 = vld [vmem:[%s1 + $0x68] sm:$0xf]
    %v73 = vld [vmem:[%s1 + $0x6c] sm:$0xf]
    %v74 = vld [vmem:[%s1 + $0x70] sm:$0xf]
    %v75 = vld [vmem:[%s1 + $0x74] sm:$0xf]
    %v76 = vld [vmem:[%s1 + $0x78] sm:$0xf]
    %v77 = vld [vmem:[%s1 + $0x7c] sm:$0xf]
    %v78 = vld [vmem:[%s1 + $0x80] sm:$0xf]
    %v79 = vld [vmem:[%s1 + $0x84] sm:$0xf]
    %v80 = vld [vmem:[%s1 + $0x88] sm:$0xf]
    %v81 = vld [vmem:[%s1 + $0x8c] sm:$0xf]
    %v82 = vld [vmem:[%s1 + $0x90] sm:$0xf]
    %v83 = vld [vmem:[%s1 + $0x94] sm:$0xf]
    %v84 = vld [vmem:[%s1 + $0x98] sm:$0xf]
    %v85 = vld [vmem:[%s1 + $0x9c] sm:$0xf]
    %v86 = vld [vmem:[%s1 + $0xa0] sm:$0xf]
    %v87 = vld [vmem:[%s1 + $0xa4] sm:$0xf]
    %v88 = vld [vmem:[%s1 + $0xa8] sm:$0xf]
    %v89 = vld [vmem:[%s1 + $0xac] sm:$0xf]
    %v90 = vld [vmem:[%s1 + $0xb0] sm:$0xf]
    %v91 = vld [vmem:[%s1 + $0xb4] sm:$0xf]
    %v92 = vld [vmem:[%s1 + $0xb8] sm:$0xf]
    %v93 = vld [vmem:[%s1 + $0xbc] sm:$0xf]
    %v94 = vld [vmem:[%s1 + $0xc0] sm:$0xf]
    %v95 = vld [vmem:[%s1 + $0xc4] sm:$0xf]
    %v96 = vld [vmem:[%s1 + $0xc8] sm:$0xf]
    %v97 = vld [vmem:[%s1 + $0xcc] sm:$0xf]
    %v98 = vld [vmem:[%s1 + $0xd0] sm:$0xf]
    %v99 = vld [vmem:[%s1 + $0xd4] sm:$0xf]
    %v100 = vld [vmem:[%s1 + $0xd8] sm:$0xf]
    %v101 = vld [vmem:[%s1 + $0xdc] sm:$0xf]
    %v102 = vld [vmem:[%s1 + $0xe0] sm:$0xf]
    %v103 = vld [vmem:[%s1 + $0xe4] sm:$0xf]
    %v104 = vld [vmem:[%s1 + $0xe8] sm:$0xf]
    %v105 = vld [vmem:[%s1 + $0xec] sm:$0xf]
    %v106 = vld [vmem:[%s1 + $0xf0] sm:$0xf]
    %v107 = vld [vmem:[%s1 + $0xf4] sm:$0xf]
    %v108 = vld [vmem:[%s1 + $0xf8] sm:$0xf]
    %v109 = vld [vmem:[%s1 + $0xfc] sm:$0xf]
    %v110 = vld [vmem:[%s1 + $0x100] sm:$0xf]
    %v111 = vld [vmem:[%s1 + $0x104] sm:$0xf]
    %v112 = vld [vmem:[%s1 + $0x108] sm:$0xf]
    %v113 = vld [vmem:[%s1 + $0x10c] sm:$0xf]
    %v114 = vld [vmem:[%s1 + $0x110] sm:$0xf]
    %v115 = vld [vmem:[%s1 + $0x114] sm:$0xf]
    %v116 = vld [vmem:[%s1 + $0x118] sm:$0xf]
    %v117 = vld [vmem:[%s1 + $0x11c] sm:$0xf]
    %v118 = vld [vmem:[%s1 + $0x120] sm:$0xf]
    %v119 = vld [vmem:[%s1 + $0x124] sm:$0xf]
    %v120 = vld [vmem:[%s1 + $0x128] sm:$0xf]
    %v121 = vld [vmem:[%s1 + $0x12c] sm:$0xf]
    %v122 = vld [vmem:[%s1 + $0x130] sm:$0xf]
    %v123 = vld [vmem:[%s1 + $0x134] sm:$0xf]
    %v124 = vld [vmem:[%s1 + $0x138] sm:$0xf]
    %v125 = vld [vmem:[%s1 + $0x13c] sm:$0xf]
    %v126 = vld [vmem:[%s1 + $0x140] sm:$0xf]
    %v127 = vld [vmem:[%s1 + $0x144] sm:$0xf]
    %v128 = vld [vmem:[%s1 + $0x148] sm:$0xf]
    %v129 = vld [vmem:[%s1 + $0x14c] sm:$0xf]
    %v130 = vld [vmem:[%s1 + $0x150] sm:$0xf]
    %v131 = vld [vmem:[%s1 + $0x154] sm:$0xf]
    %v132 = vld [vmem:[%s1 + $0x158] sm:$0xf]
    %v133 = vld [vmem:[%s1 + $0x15c] sm:$0xf]
    %v134 = vld [vmem:[%s1 + $0x160] sm:$0xf]
    %v135 = vld [vmem:[%s1 + $0x164] sm:$0xf]
    %v136 = vld [vmem:[%s1 + $0x168] sm:$0xf]
    %v137 = vld [vmem:[%s1 + $0x16c] sm:$0xf]
    %v138 = vld [vmem:[%s1 + $0x170] sm:$0xf]
    %v139 = vld [vmem:[%s1 + $0x174] sm:$0xf]
    %v140 = vld [vmem:[%s1 + $0x178] sm:$0xf]
    %v141 = vld [vmem:[%s1 + $0x17c] sm:$0xf]
    %v142 = vld [vmem:[%s1 + $0x180] sm:$0xf]
    %v143 = vld [vmem:[%s1 + $0x184] sm:$0xf]
    %v144 = vld [vmem:[%s1 + $0x188] sm:$0xf]
    %v145 = vld [vmem:[%s1 + $0x18c] sm:$0xf]
    %v146 = vld [vmem:[%s1 + $0x190] sm:$0xf]
    %v147 = vld [vmem:[%s1 + $0x194] sm:$0xf]
    %v148 = vld [vmem:[%s1 + $0x198] sm:$0xf]
    %v149 = vld [vmem:[%s1 + $0x19c] sm:$0xf]
    %v150 = vld [vmem:[%s1 + $0x1a0] sm:$0xf]
    %v151 = vld [vmem:[%s1 + $0x1a4] sm:$0xf]
    %v152 = vld [vmem:[%s1 + $0x1a8] sm:$0xf]
    %v153 = vld [vmem:[%s1 + $0x1ac] sm:$0xf]
    %v154 = vld [vmem:[%s1 + $0x1b0] sm:$0xf]
    %v155 = vld [vmem:[%s1 + $0x1b4] sm:$0xf]
    %v156 = vld [vmem:[%s1 + $0x1b8] sm:$0xf]
    %v157 = vld [vmem:[%s1 + $0x1bc] sm:$0xf]
    %v158 = vld [vmem:[%s1 + $0x1c0] sm:$0xf]
    %v159 = vld [vmem:[%s1 + $0x1c4] sm:$0xf]
    %v160 = vld [vmem:[%s1 + $0x1c8] sm:$0xf]
    %v161 = vld [vmem:[%s1 + $0x1cc] sm:$0xf]
    %v162 = vld [vmem:[%s1 + $0x1d0] sm:$0xf]
    %v163 = vld [vmem:[%s1 + $0x1d4] sm:$0xf]
    %v164 = vld [vmem:[%s1 + $0x1d8] sm:$0xf]
    %v165 = vld [vmem:[%s1 + $0x1dc] sm:$0xf]
    %v166 = vld [vmem:[%s1 + $0x1e0] sm:$0xf]
    %v167 = vld [vmem:[%s1 + $0x1e4] sm:$0xf]
    %v168 = vld [vmem:[%s1 + $0x1e8] sm:$0xf]
    %v169 = vld [vmem:[%s1 + $0x1ec] sm:$0xf]
    %v170 = vld [vmem:[%s1 + $0x1f0] sm:$0xf]
    %v171 = vld [vmem:[%s1 + $0x1f4] sm:$0xf]
    %v172 = vld [vmem:[%s1 + $0x1f8] sm:$0xf]
    %v173 = vld [vmem:[%s1 + $0x1fc] sm:$0xf]
    %v174 = vld [vmem:[%s2] sm:$0x1]
    %v176 = vlaneseq
    %v177 = vshrl.u32 %v176, 7
    %v178 = vsub.s32 0, %v177
    %v179 = vrot.slane %v174, %v178
    %v309 = vunpack.c.l.b16 %v46
    %v310 = vunpack.c.l.b16 %v47
    %v311 = vunpack.c.l.b16 %v48
    %v312 = vunpack.c.l.b16 %v49
    %v313 = vunpack.c.l.b16 %v50
    %v314 = vunpack.c.l.b16 %v51
    %v315 = vunpack.c.l.b16 %v52
    %v316 = vunpack.c.l.b16 %v53
    %v317 = vunpack.c.l.b16 %v54
    %v318 = vunpack.c.l.b16 %v55
    %v319 = vunpack.c.l.b16 %v56
    %v320 = vunpack.c.l.b16 %v57
    %v321 = vunpack.c.l.b16 %v58
    %v322 = vunpack.c.l.b16 %v59
    %v323 = vunpack.c.l.b16 %v60
    %v324 = vunpack.c.l.b16 %v61
    %v325 = vunpack.c.l.b16 %v62
    %v326 = vunpack.c.l.b16 %v63
    %v327 = vunpack.c.l.b16 %v64
    %v328 = vunpack.c.l.b16 %v65
    %v329 = vunpack.c.l.b16 %v66
    %v330 = vunpack.c.l.b16 %v67
    %v331 = vunpack.c.l.b16 %v68
    %v332 = vunpack.c.l.b16 %v69
    %v333 = vunpack.c.l.b16 %v70
    %v334 = vunpack.c.l.b16 %v71
    %v335 = vunpack.c.l.b16 %v72
    %v336 = vunpack.c.l.b16 %v73
    %v337 = vunpack.c.l.b16 %v74
    %v338 = vunpack.c.l.b16 %v75
    %v339 = vunpack.c.l.b16 %v76
    %v340 = vunpack.c.l.b16 %v77
    %v341 = vunpack.c.l.b16 %v78
    %v342 = vunpack.c.l.b16 %v79
    %v343 = vunpack.c.l.b16 %v80
    %v344 = vunpack.c.l.b16 %v81
    %v345 = vunpack.c.l.b16 %v82
    %v346 = vunpack.c.l.b16 %v83
    %v347 = vunpack.c.l.b16 %v84
    %v348 = vunpack.c.l.b16 %v85
    %v349 = vunpack.c.l.b16 %v86
    %v350 = vunpack.c.l.b16 %v87
    %v351 = vunpack.c.l.b16 %v88
    %v352 = vunpack.c.l.b16 %v89
    %v353 = vunpack.c.l.b16 %v90
    %v354 = vunpack.c.l.b16 %v91
    %v355 = vunpack.c.l.b16 %v92
    %v356 = vunpack.c.l.b16 %v93
    %v357 = vunpack.c.l.b16 %v94
    %v358 = vunpack.c.l.b16 %v95
    %v359 = vunpack.c.l.b16 %v96
    %v360 = vunpack.c.l.b16 %v97
    %v361 = vunpack.c.l.b16 %v98
    %v362 = vunpack.c.l.b16 %v99
    %v363 = vunpack.c.l.b16 %v100
    %v364 = vunpack.c.l.b16 %v101
    %v365 = vunpack.c.l.b16 %v102
    %v366 = vunpack.c.l.b16 %v103
    %v367 = vunpack.c.l.b16 %v104
    %v368 = vunpack.c.l.b16 %v105
    %v369 = vunpack.c.l.b16 %v106
    %v370 = vunpack.c.l.b16 %v107
    %v371 = vunpack.c.l.b16 %v108
    %v372 = vunpack.c.l.b16 %v109
    %v373 = vunpack.c.l.b16 %v110
    %v374 = vunpack.c.l.b16 %v111
    %v375 = vunpack.c.l.b16 %v112
    %v376 = vunpack.c.l.b16 %v113
    %v377 = vunpack.c.l.b16 %v114
    %v378 = vunpack.c.l.b16 %v115
    %v379 = vunpack.c.l.b16 %v116
    %v380 = vunpack.c.l.b16 %v117
    %v381 = vunpack.c.l.b16 %v118
    %v382 = vunpack.c.l.b16 %v119
    %v383 = vunpack.c.l.b16 %v120
    %v384 = vunpack.c.l.b16 %v121
    %v385 = vunpack.c.l.b16 %v122
    %v386 = vunpack.c.l.b16 %v123
    %v387 = vunpack.c.l.b16 %v124
    %v388 = vunpack.c.l.b16 %v125
    %v389 = vunpack.c.l.b16 %v126
    %v390 = vunpack.c.l.b16 %v127
    %v391 = vunpack.c.l.b16 %v128
    %v392 = vunpack.c.l.b16 %v129
    %v393 = vunpack.c.l.b16 %v130
    %v394 = vunpack.c.l.b16 %v131
    %v395 = vunpack.c.l.b16 %v132
    %v396 = vunpack.c.l.b16 %v133
    %v397 = vunpack.c.l.b16 %v134
    %v398 = vunpack.c.l.b16 %v135
    %v399 = vunpack.c.l.b16 %v136
    %v400 = vunpack.c.l.b16 %v137
    %v401 = vunpack.c.l.b16 %v138
    %v402 = vunpack.c.l.b16 %v139
    %v403 = vunpack.c.l.b16 %v140
    %v404 = vunpack.c.l.b16 %v141
    %v405 = vunpack.c.l.b16 %v142
    %v406 = vunpack.c.l.b16 %v143
    %v407 = vunpack.c.l.b16 %v144
    %v408 = vunpack.c.l.b16 %v145
    %v409 = vunpack.c.l.b16 %v146
    %v410 = vunpack.c.l.b16 %v147
    %v411 = vunpack.c.l.b16 %v148
    %v412 = vunpack.c.l.b16 %v149
    %v413 = vunpack.c.l.b16 %v150
    %v414 = vunpack.c.l.b16 %v151
    %v415 = vunpack.c.l.b16 %v152
    %v416 = vunpack.c.l.b16 %v153
    %v417 = vunpack.c.l.b16 %v154
    %v418 = vunpack.c.l.b16 %v155
    %v419 = vunpack.c.l.b16 %v156
    %v420 = vunpack.c.l.b16 %v157
    %v421 = vunpack.c.l.b16 %v158
    %v422 = vunpack.c.l.b16 %v159
    %v423 = vunpack.c.l.b16 %v160
    %v424 = vunpack.c.l.b16 %v161
    %v425 = vunpack.c.l.b16 %v162
    %v426 = vunpack.c.l.b16 %v163
    %v427 = vunpack.c.l.b16 %v164
    %v428 = vunpack.c.l.b16 %v165
    %v429 = vunpack.c.l.b16 %v166
    %v430 = vunpack.c.l.b16 %v167
    %v431 = vunpack.c.l.b16 %v168
    %v432 = vunpack.c.l.b16 %v169
    %v433 = vunpack.c.l.b16 %v170
    %v434 = vunpack.c.l.b16 %v171
    %v435 = vunpack.c.l.b16 %v172
    %v436 = vunpack.c.l.b16 %v173
    %v437 = vpack.c.b16 %v310, %v309
    %v438 = vpack.c.b16 %v312, %v311
    %v439 = vpack.c.b16 %v314, %v313
    %v440 = vpack.c.b16 %v316, %v315
    %v441 = vpack.c.b16 %v318, %v317
    %v442 = vpack.c.b16 %v320, %v319
    %v443 = vpack.c.b16 %v322, %v321
    %v444 = vpack.c.b16 %v324, %v323
    %v445 = vpack.c.b16 %v326, %v325
    %v446 = vpack.c.b16 %v328, %v327
    %v447 = vpack.c.b16 %v330, %v329
    %v448 = vpack.c.b16 %v332, %v331
    %v449 = vpack.c.b16 %v334, %v333
    %v450 = vpack.c.b16 %v336, %v335
    %v451 = vpack.c.b16 %v338, %v337
    %v452 = vpack.c.b16 %v340, %v339
    %v453 = vpack.c.b16 %v342, %v341
    %v454 = vpack.c.b16 %v344, %v343
    %v455 = vpack.c.b16 %v346, %v345
    %v456 = vpack.c.b16 %v348, %v347
    %v457 = vpack.c.b16 %v350, %v349
    %v458 = vpack.c.b16 %v352, %v351
    %v459 = vpack.c.b16 %v354, %v353
    %v460 = vpack.c.b16 %v356, %v355
    %v461 = vpack.c.b16 %v358, %v357
    %v462 = vpack.c.b16 %v360, %v359
    %v463 = vpack.c.b16 %v362, %v361
    %v464 = vpack.c.b16 %v364, %v363
    %v465 = vpack.c.b16 %v366, %v365
    %v466 = vpack.c.b16 %v368, %v367
    %v467 = vpack.c.b16 %v370, %v369
    %v468 = vpack.c.b16 %v372, %v371
    %v469 = vpack.c.b16 %v374, %v373
    %v470 = vpack.c.b16 %v376, %v375
    %v471 = vpack.c.b16 %v378, %v377
    %v472 = vpack.c.b16 %v380, %v379
    %v473 = vpack.c.b16 %v382, %v381
    %v474 = vpack.c.b16 %v384, %v383
    %v475 = vpack.c.b16 %v386, %v385
    %v476 = vpack.c.b16 %v388, %v387
    %v477 = vpack.c.b16 %v390, %v389
    %v478 = vpack.c.b16 %v392, %v391
    %v479 = vpack.c.b16 %v394, %v393
    %v480 = vpack.c.b16 %v396, %v395
    %v481 = vpack.c.b16 %v398, %v397
    %v482 = vpack.c.b16 %v400, %v399
    %v483 = vpack.c.b16 %v402, %v401
    %v484 = vpack.c.b16 %v404, %v403
    %v485 = vpack.c.b16 %v406, %v405
    %v486 = vpack.c.b16 %v408, %v407
    %v487 = vpack.c.b16 %v410, %v409
    %v488 = vpack.c.b16 %v412, %v411
    %v489 = vpack.c.b16 %v414, %v413
    %v490 = vpack.c.b16 %v416, %v415
    %v491 = vpack.c.b16 %v418, %v417
    %v492 = vpack.c.b16 %v420, %v419
    %v493 = vpack.c.b16 %v422, %v421
    %v494 = vpack.c.b16 %v424, %v423
    %v495 = vpack.c.b16 %v426, %v425
    %v496 = vpack.c.b16 %v428, %v427
    %v497 = vpack.c.b16 %v430, %v429
    %v498 = vpack.c.b16 %v432, %v431
    %v499 = vpack.c.b16 %v434, %v433
    %v500 = vpack.c.b16 %v436, %v435
    %565 = vmatprep.subr.bf16.mxu0 0
    %566 = vmatpush1.bf16.msra.mxu0 %v437
    %567 = vmatprep.subr.bf16.mxu0 0
    %568 = vmatpush1.bf16.msra.mxu0 %v438
    %569 = vmatprep.subr.bf16.mxu0 0
    %570 = vmatpush1.bf16.msra.mxu0 %v439
    %571 = vmatprep.subr.bf16.mxu0 0
    %572 = vmatpush1.bf16.msra.mxu0 %v440
    %573 = vmatprep.subr.bf16.mxu0 0
    %574 = vmatpush1.bf16.msra.mxu0 %v441
    %575 = vmatprep.subr.bf16.mxu0 0
    %576 = vmatpush1.bf16.msra.mxu0 %v442
    %577 = vmatprep.subr.bf16.mxu0 0
    %578 = vmatpush1.bf16.msra.mxu0 %v443
    %579 = vmatprep.subr.bf16.mxu0 0
    %580 = vmatpush1.bf16.msra.mxu0 %v444
    %581 = vmatprep.subr.bf16.mxu0 0
    %582 = vmatpush1.bf16.msra.mxu0 %v445
    %583 = vmatprep.subr.bf16.mxu0 0
    %584 = vmatpush1.bf16.msra.mxu0 %v446
    %585 = vmatprep.subr.bf16.mxu0 0
    %586 = vmatpush1.bf16.msra.mxu0 %v447
    %587 = vmatprep.subr.bf16.mxu0 0
    %588 = vmatpush1.bf16.msra.mxu0 %v448
    %589 = vmatprep.subr.bf16.mxu0 0
    %590 = vmatpush1.bf16.msra.mxu0 %v449
    %591 = vmatprep.subr.bf16.mxu0 0
    %592 = vmatpush1.bf16.msra.mxu0 %v450
    %593 = vmatprep.subr.bf16.mxu0 0
    %594 = vmatpush1.bf16.msra.mxu0 %v451
    %595 = vmatprep.subr.bf16.mxu0 0
    %596 = vmatpush1.bf16.msra.mxu0 %v452
    %597 = vmatprep.mubr.bf16.mxu0 %v39
    %598 = vmatmul.mubr.bf16.gmra.mrb[0].mxu0 %v38
    %v599 = vpop.f32.mrb[0].mxu0
    %v600 = vadd.f32 %v179, %v599
    %v601 = vpop.f32.mrb[0].mxu0
    %v602 = vpop.f32.mrb[0].mxu0
    %v603 = vadd.f32 %v179, %v602
    %v604 = vpop.f32.mrb[0].mxu0
    %605 = vdwg.mxu0
    %606 = vmatprep.subr.bf16.mxu0 0
    %607 = vmatpush1.bf16.msra.mxu0 %v453
    %608 = vmatprep.subr.bf16.mxu0 0
    %609 = vmatpush1.bf16.msra.mxu0 %v454
    %610 = vmatprep.subr.bf16.mxu0 0
    %611 = vmatpush1.bf16.msra.mxu0 %v455
    %612 = vmatprep.subr.bf16.mxu0 0
    %613 = vmatpush1.bf16.msra.mxu0 %v456
    %614 = vmatprep.subr.bf16.mxu0 0
    %615 = vmatpush1.bf16.msra.mxu0 %v457
    %616 = vmatprep.subr.bf16.mxu0 0
    %617 = vmatpush1.bf16.msra.mxu0 %v458
    %618 = vmatprep.subr.bf16.mxu0 0
    %619 = vmatpush1.bf16.msra.mxu0 %v459
    %620 = vmatprep.subr.bf16.mxu0 0
    %621 = vmatpush1.bf16.msra.mxu0 %v460
    %622 = vmatprep.subr.bf16.mxu0 0
    %623 = vmatpush1.bf16.msra.mxu0 %v461
    %624 = vmatprep.subr.bf16.mxu0 0
    %625 = vmatpush1.bf16.msra.mxu0 %v462
    %626 = vmatprep.subr.bf16.mxu0 0
    %627 = vmatpush1.bf16.msra.mxu0 %v463
    %628 = vmatprep.subr.bf16.mxu0 0
    %629 = vmatpush1.bf16.msra.mxu0 %v464
    %630 = vmatprep.subr.bf16.mxu0 0
    %631 = vmatpush1.bf16.msra.mxu0 %v465
    %632 = vmatprep.subr.bf16.mxu0 0
    %633 = vmatpush1.bf16.msra.mxu0 %v466
    %634 = vmatprep.subr.bf16.mxu0 0
    %635 = vmatpush1.bf16.msra.mxu0 %v467
    %636 = vmatprep.subr.bf16.mxu0 0
    %637 = vmatpush1.bf16.msra.mxu0 %v468
    %638 = vmatprep.mubr.bf16.mxu0 %v41
    %639 = vmatmul.mubr.bf16.gmra.mrb[0].mxu0 %v40
    %v640 = vpop.f32.mrb[0].mxu0
    %v641 = vadd.f32 %v600, %v640
    %v642 = vpop.f32.mrb[0].mxu0
    %v643 = vpop.f32.mrb[0].mxu0
    %v644 = vadd.f32 %v603, %v643
    %v645 = vpop.f32.mrb[0].mxu0
    %646 = vdwg.mxu0
    %647 = vmatprep.subr.bf16.mxu0 0
    %648 = vmatpush1.bf16.msra.mxu0 %v469
    %649 = vmatprep.subr.bf16.mxu0 0
    %650 = vmatpush1.bf16.msra.mxu0 %v470
    %651 = vmatprep.subr.bf16.mxu0 0
    %652 = vmatpush1.bf16.msra.mxu0 %v471
    %653 = vmatprep.subr.bf16.mxu0 0
    %654 = vmatpush1.bf16.msra.mxu0 %v472
    %655 = vmatprep.subr.bf16.mxu0 0
    %656 = vmatpush1.bf16.msra.mxu0 %v473
    %657 = vmatprep.subr.bf16.mxu0 0
    %658 = vmatpush1.bf16.msra.mxu0 %v474
    %659 = vmatprep.subr.bf16.mxu0 0
    %660 = vmatpush1.bf16.msra.mxu0 %v475
    %661 = vmatprep.subr.bf16.mxu0 0
    %662 = vmatpush1.bf16.msra.mxu0 %v476
    %663 = vmatprep.subr.bf16.mxu0 0
    %664 = vmatpush1.bf16.msra.mxu0 %v477
    %665 = vmatprep.subr.bf16.mxu0 0
    %666 = vmatpush1.bf16.msra.mxu0 %v478
    %667 = vmatprep.subr.bf16.mxu0 0
    %668 = vmatpush1.bf16.msra.mxu0 %v479
    %669 = vmatprep.subr.bf16.mxu0 0
    %670 = vmatpush1.bf16.msra.mxu0 %v480
    %671 = vmatprep.subr.bf16.mxu0 0
    %672 = vmatpush1.bf16.msra.mxu0 %v481
    %673 = vmatprep.subr.bf16.mxu0 0
    %674 = vmatpush1.bf16.msra.mxu0 %v482
    %675 = vmatprep.subr.bf16.mxu0 0
    %676 = vmatpush1.bf16.msra.mxu0 %v483
    %677 = vmatprep.subr.bf16.mxu0 0
    %678 = vmatpush1.bf16.msra.mxu0 %v484
    %679 = vmatprep.mubr.bf16.mxu0 %v43
    %680 = vmatmul.mubr.bf16.gmra.mrb[0].mxu0 %v42
    %v681 = vpop.f32.mrb[0].mxu0
    %v682 = vadd.f32 %v641, %v681
    %v683 = vpop.f32.mrb[0].mxu0
    %v684 = vpop.f32.mrb[0].mxu0
    %v685 = vadd.f32 %v644, %v684
    %v686 = vpop.f32.mrb[0].mxu0
    %687 = vdwg.mxu0
    %688 = vmatprep.subr.bf16.mxu0 0
    %689 = vmatpush1.bf16.msra.mxu0 %v485
    %690 = vmatprep.subr.bf16.mxu0 0
    %691 = vmatpush1.bf16.msra.mxu0 %v486
    %692 = vmatprep.subr.bf16.mxu0 0
    %693 = vmatpush1.bf16.msra.mxu0 %v487
    %694 = vmatprep.subr.bf16.mxu0 0
    %695 = vmatpush1.bf16.msra.mxu0 %v488
    %696 = vmatprep.subr.bf16.mxu0 0
    %697 = vmatpush1.bf16.msra.mxu0 %v489
    %698 = vmatprep.subr.bf16.mxu0 0
    %699 = vmatpush1.bf16.msra.mxu0 %v490
    %700 = vmatprep.subr.bf16.mxu0 0
    %701 = vmatpush1.bf16.msra.mxu0 %v491
    %702 = vmatprep.subr.bf16.mxu0 0
    %703 = vmatpush1.bf16.msra.mxu0 %v492
    %704 = vmatprep.subr.bf16.mxu0 0
    %705 = vmatpush1.bf16.msra.mxu0 %v493
    %706 = vmatprep.subr.bf16.mxu0 0
    %707 = vmatpush1.bf16.msra.mxu0 %v494
    %708 = vmatprep.subr.bf16.mxu0 0
    %709 = vmatpush1.bf16.msra.mxu0 %v495
    %710 = vmatprep.subr.bf16.mxu0 0
    %711 = vmatpush1.bf16.msra.mxu0 %v496
    %712 = vmatprep.subr.bf16.mxu0 0
    %713 = vmatpush1.bf16.msra.mxu0 %v497
    %714 = vmatprep.subr.bf16.mxu0 0
    %715 = vmatpush1.bf16.msra.mxu0 %v498
    %716 = vmatprep.subr.bf16.mxu0 0
    %717 = vmatpush1.bf16.msra.mxu0 %v499
    %718 = vmatprep.subr.bf16.mxu0 0
    %719 = vmatpush1.bf16.msra.mxu0 %v500
    %720 = vmatprep.mubr.bf16.mxu0 %v45
    %721 = vmatmul.mubr.bf16.gmra.mrb[0].mxu0 %v44
    %v722 = vpop.f32.mrb[0].mxu0
    %v723 = vadd.f32 %v682, %v722
    %v724 = vpop.f32.mrb[0].mxu0
    %v725 = vpop.f32.mrb[0].mxu0
    %v726 = vadd.f32 %v685, %v725
    %v727 = vpop.f32.mrb[0].mxu0
    %728 = vdwg.mxu0
    %v729 = vxor.u32 %v723, 2147483648
    %v730 = vxor.u32 %v726, 2147483648
    %v731 = vmul.f32 %v729, 1.442695
    %v732 = vpow.pop %v731
    %v733 = vmul.f32 %v730, 1.442695
    %v734 = vpow.pop %v733
    %v735 = vadd.f32 %v732, 1.0
    %v736 = vadd.f32 %v734, 1.0
    %v737 = vrcp.pop %v735
    %v738 = vmul.f32 1.0, %v737
    %v739 = vrcp.pop %v736
    %v740 = vmul.f32 1.0, %v739
    %v741 = vpack.c.bf16 %v740, %v738
    %v742 = vld [vmem:[%s3] sm:$0xf]
    %v743 = vld [vmem:[%s3 + $0x4] sm:$0xf]
    %v744 = vld [vmem:[%s3 + $0x8] sm:$0xf]
    %v745 = vld [vmem:[%s3 + $0xc] sm:$0xf]
    %v746 = vld [vmem:[%s4] sm:$0x1]
    %v748 = vlaneseq
    %v749 = vshrl.u32 %v748, 7
    %v750 = vsub.s32 0, %v749
    %v751 = vrot.slane %v746, %v750
    %v757 = vunpack.c.l.b16 %v742
    %v758 = vunpack.c.l.b16 %v743
    %v759 = vunpack.c.l.b16 %v744
    %v760 = vunpack.c.l.b16 %v745
    %v761 = vpack.c.b16 %v758, %v757
    %v762 = vpack.c.b16 %v760, %v759
    %vm765 = vcmask 261120
    %v767 = vsel %vm765, %v741, 0
    %769 = vmatprep.subr.bf16.mxu0 0
    %770 = vmatpush1.bf16.msra.mxu0 %v761
    %771 = vmatprep.subr.bf16.mxu0 0
    %772 = vmatpush1.bf16.msra.mxu0 %v762
    %773 = vmatprep.subr.bf16.mxu0 0
    %774 = vmatpush1.bf16.msra.mxu0 0
    %775 = vmatprep.subr.bf16.mxu0 0
    %776 = vmatpush1.bf16.msra.mxu0 0
    %777 = vmatprep.subr.bf16.mxu0 0
    %778 = vmatpush1.bf16.msra.mxu0 0
    %779 = vmatprep.subr.bf16.mxu0 0
    %780 = vmatpush1.bf16.msra.mxu0 0
    %781 = vmatprep.subr.bf16.mxu0 0
    %782 = vmatpush1.bf16.msra.mxu0 0
    %783 = vmatprep.subr.bf16.mxu0 0
    %784 = vmatpush1.bf16.msra.mxu0 0
    %785 = vmatprep.subr.bf16.mxu0 0
    %786 = vmatpush1.bf16.msra.mxu0 0
    %787 = vmatprep.subr.bf16.mxu0 0
    %788 = vmatpush1.bf16.msra.mxu0 0
    %789 = vmatprep.subr.bf16.mxu0 0
    %790 = vmatpush1.bf16.msra.mxu0 0
    %791 = vmatprep.subr.bf16.mxu0 0
    %792 = vmatpush1.bf16.msra.mxu0 0
    %793 = vmatprep.subr.bf16.mxu0 0
    %794 = vmatpush1.bf16.msra.mxu0 0
    %795 = vmatprep.subr.bf16.mxu0 0
    %796 = vmatpush1.bf16.msra.mxu0 0
    %797 = vmatprep.subr.bf16.mxu0 0
    %798 = vmatpush1.bf16.msra.mxu0 0
    %799 = vmatprep.subr.bf16.mxu0 0
    %800 = vmatpush1.bf16.msra.mxu0 0
    %801 = vmatprep.mubr.bf16.mxu0 0
    %802 = vmatmul.mubr.bf16.gmra.mrb[0].mxu0 %v767
    %v803 = vpop.f32.mrb[0].mxu0
    %v804 = vadd.f32 %v751, %v803
    %v805 = vpop.f32.mrb[0].mxu0
    %v806 = vpop.f32.mrb[0].mxu0
    %v807 = vadd.f32 %v751, %v806
    %v808 = vpop.f32.mrb[0].mxu0
    %809 = vdwg.mxu0
    %810 = vst [vmem:[#allocation2] sm:$0xff] %v804
    %811 = vst [vmem:[#allocation2 + $0x8] sm:$0xff] %v807
    // Predicated region
    $region22: #{tpu_custom_call.1} parent=1 // pred_check
      _
    $region23: #{tpu_custom_call.1} parent=1 // pred_check_branch
      %813 = sbr.rel (0) target = $region25
    $region24: #{tpu_custom_call.1} parent=1 // pred_region
      %s815 = ssub.s32 256, 256
      %816 = vsyncadd [#allocation3], %s815
      %s817 = sshll.u32 [#allocation2], 4
      %s818 = int_to_ptr.vmem [resolvable:$true] %s817
      %823 = dma.vmem_to_hbm [thread:$0]  %s818, 256, %s5, [#allocation3], 128, 128, 8
    $region25: #{tpu_custom_call.1} parent=1 // pred_fallthru
      _
    // Predicated region
    $region26: #{tpu_custom_call.1} parent=1 // pred_check
      _
    $region27: #{tpu_custom_call.1} parent=1 // pred_check_branch
      %825 = sbr.rel (0) target = $region29
    $region28: #{tpu_custom_call.1} parent=1 // pred_region
      %826 = dma.done [#allocation3], 256
    $region29: #{tpu_custom_call.1} parent=1 // pred_fallthru
      _
    %827 = vsyncpa [#allocation3], 1

</llo_original>
